<compile_context>
chip_gen: v7x
topology: tpu7x:2x2x1
jax: 0.10.0
libtpu: 0.0.40
codegen_flags: <defaults>
</compile_context>

<pallas_src>
import jax
import jax.numpy as jnp
from jax.experimental import pallas as pl
from jax.experimental.pallas import tpu as pltpu


def _normalize_kernel(x_ref, p_ref, o_ref):
    # x_ref / o_ref : (row_block, lane_block) tiles of the (N*C, H*W) view.
    # p_ref         : (row_block, 2) f32 per-row params: [:,0]=mean, [:,1]=1/std.
    p = p_ref[...]
    m = p[:, 0:1]
    inv = p[:, 1:2]
    o_ref[...] = ((x_ref[...] - m) * inv).astype(o_ref.dtype)


def _round_up(x, m):
    return ((x + m - 1) // m) * m


def _round_down(x, m):
    return (x // m) * m


def _vmem_capacity_bytes():
    """Physical VMEM of the current chip; conservative fallback if unknown."""
    try:
        info = pltpu.get_tpu_info()
        cap = getattr(info, "vmem_capacity_bytes", None)
        if cap:
            return int(cap)
    except Exception:
        pass
    return 64 << 20  # smallest per-TC VMEM (v7x) -> safe everywhere


def _choose_blocks(total_rows, total_lanes, itemsize, target_bytes):
    """Pick (8,128)-legal block dims targeting ~target_bytes per buffer.

    Blocks need not divide the totals (grid uses cdiv; Pallas handles the
    ragged boundary blocks), so we never fall back to an oversized full dim.
    """
    target_elems = max(1024, target_bytes // itemsize)
    row_align = max(8, 32 // itemsize)   # f32: 8, bf16: 16, int8/fp8: 32
    lane_align = 128

    # Lane (last) dim: keep it full (lane-dense) when even `row_align` rows of
    # it fit the budget; otherwise tile it in 128-multiples.
    if total_lanes * row_align <= target_elems:
        lane_block = total_lanes
    else:
        lane_block = max(lane_align,
                         _round_down(target_elems // row_align, lane_align))

    rows_budget = max(row_align, target_elems // lane_block)
    if total_rows <= rows_budget:
        row_block = total_rows                      # full dim: always legal
    else:
        row_block = max(row_align, _round_down(rows_budget, row_align))
    return row_block, lane_block, row_align


def normalize(x: jax.Array, mean: jax.Array, std: jax.Array,
              *, min_pallas_bytes: int = 1 << 20) -> jax.Array:
    """(x - mean[None,:,None,None]) / std[None,:,None,None] for NCHW x."""
    N, C, H, W = x.shape
    mean32 = jnp.asarray(mean, jnp.float32).reshape(C)
    std32 = jnp.asarray(std, jnp.float32).reshape(C)

    total_rows = N * C
    total_lanes = H * W
    itemsize = jnp.dtype(x.dtype).itemsize
    total_bytes = total_rows * total_lanes * itemsize

    if total_bytes < min_pallas_bytes:
        # Tiny-input fast path: fixed pallas_call/pipeline cost dominates.
        m = mean32.astype(x.dtype)[None, :, None, None]
        s = std32.astype(x.dtype)[None, :, None, None]
        return (x - m) / s

    # Tiny (C,)-sized param prep (does not touch the big tensor):
    # divide -> reciprocal multiply, packed as one (N*C, 2) f32 stream.
    # Row ordering: row = n*C + c, matching the (N*C, H*W) reshape.
    inv32 = 1.0 / std32
    mean_rows = jnp.tile(mean32, N)
    inv_rows = jnp.tile(inv32, N)
    params = jnp.stack([mean_rows, inv_rows], axis=-1)   # (N*C, 2) f32

    x2 = x.reshape(total_rows, total_lanes)

    cap = _vmem_capacity_bytes()
    # Per-buffer block target: bigger on high-bandwidth/small-VMEM chips (v7x),
    # ~4 MiB elsewhere (diminishing returns beyond that on v5e/v6e).
    target_bytes = (6 << 20) if cap <= (64 << 20) else (4 << 20)
    row_block, lane_block, row_align = _choose_blocks(
        total_rows, total_lanes, itemsize, target_bytes)

    grid_rows = pl.cdiv(total_rows, row_block)
    grid_lanes = pl.cdiv(total_lanes, lane_block)

    # v7x megacore: guarantee >= 2 parallel blocks so both TCs stream data.
    if grid_rows * grid_lanes < 2 and total_rows > row_align:
        row_block = min(row_block,
                        _round_up(pl.cdiv(total_rows, 2), row_align))
        grid_rows = pl.cdiv(total_rows, row_block)

    grid = (grid_rows, grid_lanes)

    # Explicit scoped-VMEM budget: double-buffered in/out x tiles + the
    # (lane-padded) f32 param tiles, with headroom; clamped below physical.
    x_block_bytes = row_block * lane_block * itemsize
    p_block_bytes = _round_up(row_block, 8) * 128 * 4
    needed = 2 * (2 * x_block_bytes + p_block_bytes)
    vmem_limit = int(min(int(0.75 * cap),
                         max(needed * 5 // 4 + (2 << 20), 16 << 20)))

    out2 = pl.pallas_call(
        _normalize_kernel,
        out_shape=jax.ShapeDtypeStruct((total_rows, total_lanes), x.dtype),
        grid=grid,
        in_specs=[
            pl.BlockSpec((row_block, lane_block), lambda i, j: (i, j)),
            pl.BlockSpec((row_block, 2), lambda i, j: (i, 0)),
        ],
        out_specs=pl.BlockSpec((row_block, lane_block), lambda i, j: (i, j)),
        compiler_params=pltpu.CompilerParams(
            dimension_semantics=("parallel", "parallel"),
            vmem_limit_bytes=vmem_limit,
        ),
    )(x2, params)

    return out2.reshape(N, C, H, W)


def normalize_ref(x, mean, std):
    mean = mean.astype(x.dtype)
    std = std.astype(x.dtype)
    return (x - mean[None, :, None, None]) / std[None, :, None, None]


if __name__ == "__main__":
    key = jax.random.PRNGKey(0)
    N, C, H, W = 2, 4, 16, 16

    x = jax.random.normal(key, (N, C, H, W), dtype=jnp.float32)
    # Deterministic, distinct per-channel mean/std (module __init__ takes
    # length-C lists); N>1 guards the row = n*C + c channel mapping.
    mean = jnp.array([0.485, 0.456, 0.406, 0.5], dtype=jnp.float32)
    std = jnp.array([0.229, 0.224, 0.225, 0.25], dtype=jnp.float32)

    # min_pallas_bytes=0 forces the Pallas path even at this tiny test shape.
    out = normalize(x, mean, std, min_pallas_bytes=0)
    out = jax.block_until_ready(out)

    expected = normalize_ref(x, mean, std)
    assert out.shape == expected.shape and out.dtype == expected.dtype
    # rtol slightly relaxed vs exact-divide reference: reciprocal-multiply can
    # differ by a couple of ulps.
    assert jnp.allclose(out, expected, rtol=1e-5, atol=1e-6)

    print("KERNEL_OK")
</pallas_src>

<mosaic_0001>
module attributes {stable_mosaic.version = 11 : i64} {
  func.func @_normalize_kernel(%arg0: i32, %arg1: i32, %arg2: memref<8x256xf32, #tpu.memory_space<vmem>>, %arg3: memref<8x2xf32, #tpu.memory_space<vmem>>, %arg4: memref<8x256xf32, #tpu.memory_space<vmem>>) attributes {dimension_semantics = [#tpu.dimension_semantics<parallel>, #tpu.dimension_semantics<parallel>], iteration_bounds = array<i64: 1, 1>, scalar_prefetch = 0 : i64, scratch_operands = 0 : i64, tpu.core_type = #tpu.core_type<tc>, window_params = [{transform_indices = @transform_0, window_bounds = array<i64: 8, 256>}, {transform_indices = @transform_1, window_bounds = array<i64: 8, 2>}, {transform_indices = @transform_2, window_bounds = array<i64: 8, 256>}]} {
    %c0 = arith.constant 0 : index
    %c0_0 = arith.constant 0 : index
    %0 = vector.load %arg3[%c0, %c0_0] : memref<8x2xf32, #tpu.memory_space<vmem>>, vector<8x2xf32>
    %1 = vector.extract_strided_slice %0 {offsets = [0, 0], sizes = [8, 1], strides = [1, 1]} : vector<8x2xf32> to vector<8x1xf32>
    %2 = vector.extract_strided_slice %0 {offsets = [0, 1], sizes = [8, 1], strides = [1, 1]} : vector<8x2xf32> to vector<8x1xf32>
    %c0_1 = arith.constant 0 : index
    %c0_2 = arith.constant 0 : index
    %3 = vector.load %arg2[%c0_1, %c0_2] : memref<8x256xf32, #tpu.memory_space<vmem>>, vector<8x256xf32>
    %4 = vector.broadcast %1 : vector<8x1xf32> to vector<8x256xf32>
    %5 = arith.subf %3, %4 : vector<8x256xf32>
    %6 = vector.broadcast %2 : vector<8x1xf32> to vector<8x256xf32>
    %7 = arith.mulf %5, %6 : vector<8x256xf32>
    %c0_3 = arith.constant 0 : index
    %c0_4 = arith.constant 0 : index
    %8 = vector.load %arg4[%c0_3, %c0_4] : memref<8x256xf32, #tpu.memory_space<vmem>>, vector<8x256xf32>
    tpu.vector_store %arg4[%c0_3, %c0_4], %7 {strides = array<i32>} : memref<8x256xf32, #tpu.memory_space<vmem>>, vector<8x256xf32>,
    return
  }
  func.func @transform_0(%arg0: i32, %arg1: i32) -> (i32, i32) {
    %c0_i32 = arith.constant 0 : i32
    return %arg0, %arg1 : i32, i32
  }
  func.func @transform_1(%arg0: i32, %arg1: i32) -> (i32, i32) {
    %c0_i32 = arith.constant 0 : i32
    %c0_i32_0 = arith.constant 0 : i32
    return %arg0, %c0_i32 : i32, i32
  }
  func.func @transform_2(%arg0: i32, %arg1: i32) -> (i32, i32) {
    %c0_i32 = arith.constant 0 : i32
    return %arg0, %arg1 : i32, i32
  }
}

</mosaic_0001>

<llo_original>
// kernel: tpu_custom_call.1
$region0: #{tpu_custom_call.1}
  #allocation0 [shape = 'u32[]', space=smem, size = 0x4, offset = 0x4, fixed_abs, tag = 'smem constant byte address 0x4 - core index']
  #allocation1 [shape = 'u32[144,128]{1,0:T(1,128)}', space=vmem, size = 0x12000, scoped, tag = 'internal scratch']
  %s0 = inlined_call_operand.hbm [shape: f32[8,256], index: 0, kind: input, shape index: {}]
  %s1 = inlined_call_operand.vmem [shape: f32[8,2], index: 1, kind: input, shape index: {}]
  %s2 = inlined_call_operand.hbm [shape: f32[8,256], index: 2, kind: output, shape index: {}]
  %s3 = sld [smem:[#allocation0]]
  $region22: #{tpu_custom_call.1} parent=0
    _
  %s5 = ssub.s32 1, %s3
  %s6 = scalar_select 0, %s5, %s3
  $region1: #{tpu_custom_call.1} parent=0
    #allocation2 [shape = 'u8[8192]{0}', space=vmem, size = 0x2000, scoped, tag = 'input window, operand 0, single buffered']
    #allocation3 [shape = 's32[1]{0}', space=sflag, size = 0x4, scoped, tag = 'scoped memory for tpu_custom_call.1']
    #allocation4 [shape = 's32[1]{0}', space=sflag, size = 0x4, scoped, tag = 'scoped memory for tpu_custom_call.1']
    #allocation5 [shape = 'u8[8192]{0}', space=vmem, size = 0x2000, scoped, tag = 'output window, operand 0, single buffered']
    %7 = vsyncpa [#allocation3], 0
    %8 = vsyncpa [#allocation4], 0
    // Predicated region
    $region2: #{tpu_custom_call.1} parent=1 // pred_check
      _
    $region3: #{tpu_custom_call.1} parent=1 // pred_check_branch
      %10 = sbr.rel (0) target = $region5
    $region4: #{tpu_custom_call.1} parent=1 // pred_region
      %s12 = ssub.s32 256, 256
      %13 = vsyncadd [#allocation3], %s12
      %s15 = sshll.u32 [#allocation2], 4
      %s16 = int_to_ptr.vmem [resolvable:$true] %s15
      %18 = dma.hbm_to_vmem [thread:$0]  %s0, 256, %s16, [#allocation3]
    $region5: #{tpu_custom_call.1} parent=1 // pred_fallthru
      _
    // Predicated region
    $region6: #{tpu_custom_call.1} parent=1 // pred_check
      _
    $region7: #{tpu_custom_call.1} parent=1 // pred_check_branch
      %20 = sbr.rel (0) target = $region9
    $region8: #{tpu_custom_call.1} parent=1 // pred_region
      _
    $region9: #{tpu_custom_call.1} parent=1 // pred_fallthru
      _
    // Predicated region
    $region10: #{tpu_custom_call.1} parent=1 // pred_check
      _
    $region11: #{tpu_custom_call.1} parent=1 // pred_check_branch
      %22 = sbr.rel (0) target = $region13
    $region12: #{tpu_custom_call.1} parent=1 // pred_region
      %23 = dma.done [#allocation3], 256
    $region13: #{tpu_custom_call.1} parent=1 // pred_fallthru
      _
    %v24 = vld [vmem:[%s1] sm:$0xff]
    %v25 = vld [vmem:[#allocation2] sm:$0xff]
    %v26 = vld [vmem:[#allocation2 + $0x8] sm:$0xff]
    %28 = vset.pattern.permute.xlu0 0
    %29 = vperm.xlu0 %28, %v24
    %v30 = vpop.permute.xlu0 %29
    %v32 = vsub.f32 %v25, %v30
    %v33 = vsub.f32 %v26, %v30
    %34 = vset.pattern.permute.xlu0 1
    %35 = vperm.xlu0 %34, %v24
    %v36 = vpop.permute.xlu0 %35
    %v38 = vmul.f32 %v32, %v36
    %v39 = vmul.f32 %v33, %v36
    %40 = vst [vmem:[#allocation5] sm:$0xff] %v38
    %41 = vst [vmem:[#allocation5 + $0x8] sm:$0xff] %v39
    // Predicated region
    $region14: #{tpu_custom_call.1} parent=1 // pred_check
      _
    $region15: #{tpu_custom_call.1} parent=1 // pred_check_branch
      %43 = sbr.rel (0) target = $region17
    $region16: #{tpu_custom_call.1} parent=1 // pred_region
      %s45 = ssub.s32 256, 256
      %46 = vsyncadd [#allocation4], %s45
      %s48 = sshll.u32 [#allocation5], 4
      %s49 = int_to_ptr.vmem [resolvable:$true] %s48
      %51 = dma.vmem_to_hbm [thread:$0]  %s49, 256, %s2, [#allocation4]
    $region17: #{tpu_custom_call.1} parent=1 // pred_fallthru
      _
    // Predicated region
    $region18: #{tpu_custom_call.1} parent=1 // pred_check
      _
    $region19: #{tpu_custom_call.1} parent=1 // pred_check_branch
      %53 = sbr.rel (0) target = $region21
    $region20: #{tpu_custom_call.1} parent=1 // pred_region
      %54 = dma.done [#allocation4], 256
    $region21: #{tpu_custom_call.1} parent=1 // pred_fallthru
      _
    %55 = vsyncpa [#allocation3], 1
    %56 = vsyncpa [#allocation4], 1

</llo_original>
